<compile_context>
chip_gen: v7x
topology: tpu7x:2x2x1
jax: 0.10.0
libtpu: 0.0.40
codegen_flags: <defaults>
</compile_context>

<pallas_src>
import math

import jax
import jax.numpy as jnp
from jax.experimental import pallas as pl
from jax.experimental.pallas import tpu as pltpu


def _round_up(x, m):
    return ((x + m - 1) // m) * m


# ----------------------------------------------------------------------------
# Pallas kernel: x -> l2norm(relu(x @ W1 + b1) @ W2 + b2)      (row-tiled)
# ----------------------------------------------------------------------------
def _mlp_l2norm_kernel(x_ref, w1_ref, b1_ref, w2_ref, b2_ref, o_ref):
    x = x_ref[...]                                            # bf16 tile [TM, C_in]
    # Linear 1 (bf16 MXU, f32 accumulate) + bias + ReLU (f32 VPU)
    h = jnp.dot(x, w1_ref[...], preferred_element_type=jnp.float32) + b1_ref[...]
    h = jnp.maximum(h, 0.0)
    # Linear 2 (bf16 MXU, f32 accumulate) + bias
    y = jnp.dot(h.astype(jnp.bfloat16), w2_ref[...],
                preferred_element_type=jnp.float32) + b2_ref[...]
    # Normalize(power=2): y / (||y||_2 + 1e-7); reciprocal goes to the EUP slot.
    ssq = jnp.sum(y * y, axis=-1, keepdims=True)
    inv = pl.reciprocal(jnp.sqrt(ssq) + 1e-7, approx=True)
    o_ref[...] = (y * inv).astype(o_ref.dtype)


def mlp_l2norm(x, w1, b1, w2, b2, row_tile=512):
    """x: [N, C_in] f32; w1: [C_in, nc]; b1: [1, nc]; w2: [nc, nc]; b2: [1, nc]."""
    n, c_in = x.shape
    nc = w1.shape[1]

    # Lane-dense output/hidden width: pad nc up to a multiple of 128 with zeros
    # (zero columns contribute nothing to the matmuls or the L2 norm).
    nc_pad = max(_round_up(nc, 128), 128)
    if nc_pad != nc:
        p = nc_pad - nc
        w1 = jnp.pad(w1, ((0, 0), (0, p)))
        b1 = jnp.pad(b1, ((0, 0), (0, p)))
        w2 = jnp.pad(w2, ((0, p), (0, p)))
        b2 = jnp.pad(b2, ((0, 0), (0, p)))

    # Row tiling: 512-row tiles (multiple of 128), ragged tail masked by Pallas.
    tm = row_tile if n >= row_tile else n
    grid = (pl.cdiv(n, tm),)

    # bf16 MXU inputs (halves x/weight DMA bytes); f32 accumulation in-kernel.
    xb = x.astype(jnp.bfloat16)
    w1b = w1.astype(jnp.bfloat16)
    w2b = w2.astype(jnp.bfloat16)
    b1f = b1.astype(jnp.float32)
    b2f = b2.astype(jnp.float32)

    out = pl.pallas_call(
        _mlp_l2norm_kernel,
        out_shape=jax.ShapeDtypeStruct((n, nc_pad), jnp.float32),
        grid=grid,
        in_specs=[
            pl.BlockSpec((tm, c_in), lambda i: (i, 0)),
            # Constant index_map -> weights stay VMEM-resident across steps.
            pl.BlockSpec((c_in, nc_pad), lambda i: (0, 0)),
            pl.BlockSpec((1, nc_pad), lambda i: (0, 0)),
            pl.BlockSpec((nc_pad, nc_pad), lambda i: (0, 0)),
            pl.BlockSpec((1, nc_pad), lambda i: (0, 0)),
        ],
        out_specs=pl.BlockSpec((tm, nc_pad), lambda i: (i, 0)),
        compiler_params=pltpu.CompilerParams(
            dimension_semantics=("parallel",),
            vmem_limit_bytes=32 * 1024 * 1024,
        ),
    )(xb, w1b, b1f, w2b, b2f)
    return out[:, :nc] if nc_pad != nc else out


# ----------------------------------------------------------------------------
# Pallas kernel for the no-MLP path: pure L2 normalization of [N, C] (row-tiled)
# ----------------------------------------------------------------------------
def _l2norm_kernel(x_ref, o_ref):
    x = x_ref[...].astype(jnp.float32)
    ssq = jnp.sum(x * x, axis=-1, keepdims=True)
    inv = pl.reciprocal(jnp.sqrt(ssq) + 1e-7, approx=True)
    o_ref[...] = (x * inv).astype(o_ref.dtype)


def l2norm(x, row_tile=512):
    n, c = x.shape
    # Lane-dense width: zero-pad channels to a multiple of 128 (norm unchanged).
    c_pad = max(_round_up(c, 128), 128)
    if c_pad != c:
        x = jnp.pad(x, ((0, 0), (0, c_pad - c)))

    tm = row_tile if n >= row_tile else n
    grid = (pl.cdiv(n, tm),)

    out = pl.pallas_call(
        _l2norm_kernel,
        out_shape=jax.ShapeDtypeStruct((n, c_pad), x.dtype),
        grid=grid,
        in_specs=[pl.BlockSpec((tm, c_pad), lambda i: (i, 0))],
        out_specs=pl.BlockSpec((tm, c_pad), lambda i: (i, 0)),
        compiler_params=pltpu.CompilerParams(
            dimension_semantics=("parallel",),
            vmem_limit_bytes=32 * 1024 * 1024,
        ),
    )(x)
    return out[:, :c] if c_pad != c else out


# ----------------------------------------------------------------------------
# PatchSampleF module (JAX / Pallas)
# ----------------------------------------------------------------------------
class PatchSampleF:
    def __init__(self, use_mlp=True, init_type="normal", init_gain=0.02,
                 nc=256, seed=0):
        self.use_mlp = use_mlp
        self.nc = nc
        self.init_type = init_type
        self.init_gain = init_gain
        self.mlp_init = False
        self.mlps = []
        self._key = jax.random.PRNGKey(seed)

    def _next_key(self):
        self._key, sub = jax.random.split(self._key)
        return sub

    def create_mlp(self, feats):
        # init_net(..., 'normal', 0.02): weights ~ N(0, init_gain), biases = 0
        self.mlps = []
        for feat in feats:
            input_nc = feat.shape[1]
            w1 = self.init_gain * jax.random.normal(
                self._next_key(), (input_nc, self.nc), dtype=jnp.float32)
            b1 = jnp.zeros((1, self.nc), dtype=jnp.float32)
            w2 = self.init_gain * jax.random.normal(
                self._next_key(), (self.nc, self.nc), dtype=jnp.float32)
            b2 = jnp.zeros((1, self.nc), dtype=jnp.float32)
            self.mlps.append((w1, b1, w2, b2))
        self.mlp_init = True

    def forward(self, feats, num_patches=64, patch_ids=None):
        return_ids = []
        return_feats = []
        if self.use_mlp and (not self.mlp_init):
            self.create_mlp(feats)
        for feat_id, feat in enumerate(feats):
            # feat: [B, C, H, W, D]   (PyTorch 5-D conv layout)
            B, C = feat.shape[0], feat.shape[1]
            H, W = feat.shape[2], feat.shape[3]
            spatial = math.prod(feat.shape[2:])           # H * W * D
            feat_flat = feat.reshape(B, C, spatial)       # free reshape (channel-first)

            if num_patches > 0:
                if patch_ids is not None:
                    patch_id = jnp.asarray(patch_ids[feat_id], dtype=jnp.int32)
                else:
                    # deterministic stand-in for np.random.permutation
                    perm = jax.random.permutation(self._next_key(), spatial)
                    patch_id = perm[: int(min(num_patches, spatial))].astype(jnp.int32)
                # Gather BEFORE the channel-last transpose: only B*P*C elements
                # are moved (vs. transposing the whole feature map in HBM).
                x_sample = jnp.take(feat_flat, patch_id, axis=2)            # [B, C, P]
                x_sample = jnp.transpose(x_sample, (0, 2, 1)).reshape(-1, C)  # [B*P, C]
            else:
                patch_id = jnp.zeros((0,), dtype=jnp.int32)
                x_sample = jnp.transpose(feat_flat, (0, 2, 1)).reshape(-1, C)

            if self.use_mlp:
                w1, b1, w2, b2 = self.mlps[feat_id]
                x_sample = mlp_l2norm(x_sample, w1, b1, w2, b2)
            else:
                x_sample = l2norm(x_sample)

            if num_patches == 0:
                c_out = x_sample.shape[-1]
                x_sample = x_sample.reshape(B, spatial, c_out)
                # TODO(synk): reference's permute(0,2,1).reshape([B, C_out, H, W])
                # only works when the trailing spatial dims collapse into W;
                # emulate with the flattened [B, C_out, H, W*D] layout.
                x_sample = jnp.transpose(x_sample, (0, 2, 1)).reshape(
                    B, c_out, H, spatial // H)

            return_ids.append(patch_id)
            return_feats.append(x_sample)
        return return_feats, return_ids


# ----------------------------------------------------------------------------
# main
# ----------------------------------------------------------------------------
if __name__ == "__main__":
    key = jax.random.PRNGKey(0)
    k1, k2 = jax.random.split(key)

    # Small 5-D feature maps consistent with feat.permute(0, 2, 3, 4, 1)
    B, H, W, D = 2, 4, 4, 2
    feat0 = jax.random.normal(k1, (B, 8, H, W, D), dtype=jnp.float32)
    feat1 = jax.random.normal(k2, (B, 16, H, W, D), dtype=jnp.float32)
    feats = [feat0, feat1]

    NC = 256          # module default; multiple of 128 -> lane-dense output
    NP = 8            # num_patches -> N = B * NP = 16 rows per feature level

    sampler = PatchSampleF(use_mlp=True, init_type="normal",
                           init_gain=0.02, nc=NC, seed=0)
    out_feats, out_ids = sampler.forward(feats, num_patches=NP)

    for f in out_feats:
        jax.block_until_ready(f)

    # sanity checks: shapes, finiteness, unit L2 norm of rows (approx recip -> loose tol)
    assert out_feats[0].shape == (B * NP, NC)
    assert out_feats[1].shape == (B * NP, NC)
    assert out_ids[0].shape == (NP,)
    for f in out_feats:
        assert bool(jnp.all(jnp.isfinite(f)))
        norms = jnp.linalg.norm(f.astype(jnp.float32), axis=-1)
        assert bool(jnp.all(jnp.abs(norms - 1.0) < 2e-2))

    # also exercise the no-MLP pure-L2norm kernel once
    sampler_no_mlp = PatchSampleF(use_mlp=False, nc=NC, seed=1)
    nf, _ = sampler_no_mlp.forward([feat0], num_patches=NP)
    jax.block_until_ready(nf[0])
    assert nf[0].shape == (B * NP, 8)

    print("KERNEL_OK")
</pallas_src>

<mosaic_0001>
module attributes {stable_mosaic.version = 11 : i64} {
  func.func @_mlp_l2norm_kernel(%arg0: i32, %arg1: memref<16x8xbf16, #tpu.memory_space<vmem>>, %arg2: memref<8x256xbf16, #tpu.memory_space<vmem>>, %arg3: memref<1x256xf32, #tpu.memory_space<vmem>>, %arg4: memref<256x256xbf16, #tpu.memory_space<vmem>>, %arg5: memref<1x256xf32, #tpu.memory_space<vmem>>, %arg6: memref<16x256xf32, #tpu.memory_space<vmem>>) attributes {dimension_semantics = [#tpu.dimension_semantics<parallel>], iteration_bounds = array<i64: 1>, scalar_prefetch = 0 : i64, scratch_operands = 0 : i64, tpu.core_type = #tpu.core_type<tc>, window_params = [{transform_indices = @transform_0, window_bounds = array<i64: 16, 8>}, {pipeline_mode = #tpu.pipeline_mode<synchronous>, transform_indices = @transform_1, window_bounds = array<i64: 8, 256>}, {pipeline_mode = #tpu.pipeline_mode<synchronous>, transform_indices = @transform_2, window_bounds = array<i64: 1, 256>}, {pipeline_mode = #tpu.pipeline_mode<synchronous>, transform_indices = @transform_3, window_bounds = array<i64: 256, 256>}, {pipeline_mode = #tpu.pipeline_mode<synchronous>, transform_indices = @transform_4, window_bounds = array<i64: 1, 256>}, {transform_indices = @transform_5, window_bounds = array<i64: 16, 256>}]} {
    %c0 = arith.constant 0 : index
    %c0_0 = arith.constant 0 : index
    %0 = vector.load %arg1[%c0, %c0_0] : memref<16x8xbf16, #tpu.memory_space<vmem>>, vector<16x8xbf16>
    %c0_1 = arith.constant 0 : index
    %c0_2 = arith.constant 0 : index
    %1 = vector.load %arg2[%c0_1, %c0_2] : memref<8x256xbf16, #tpu.memory_space<vmem>>, vector<8x256xbf16>
    %cst = arith.constant dense<0.000000e+00> : vector<16x256xf32>
    %2 = tpu.matmul %0, %1, %cst {dimension_numbers = #tpu.dot_dimension_numbers<[1], [0], [0], [1], [0, 0, 1, 1], [], []>} : vector<16x8xbf16>, vector<8x256xbf16>, vector<16x256xf32> -> vector<16x256xf32>
    %c0_3 = arith.constant 0 : index
    %c0_4 = arith.constant 0 : index
    %3 = vector.load %arg3[%c0_3, %c0_4] : memref<1x256xf32, #tpu.memory_space<vmem>>, vector<1x256xf32>
    %4 = vector.broadcast %3 : vector<1x256xf32> to vector<16x256xf32>
    %5 = arith.addf %2, %4 : vector<16x256xf32>
    %cst_5 = arith.constant 0.000000e+00 : f32
    %6 = vector.broadcast %cst_5 : f32 to vector<16x256xf32>
    %7 = arith.maximumf %5, %6 : vector<16x256xf32>
    %8 = arith.truncf %7 : vector<16x256xf32> to vector<16x256xbf16>
    %c0_6 = arith.constant 0 : index
    %c0_7 = arith.constant 0 : index
    %9 = vector.load %arg4[%c0_6, %c0_7] : memref<256x256xbf16, #tpu.memory_space<vmem>>, vector<256x256xbf16>
    %cst_8 = arith.constant dense<0.000000e+00> : vector<16x256xf32>
    %10 = tpu.matmul %8, %9, %cst_8 {dimension_numbers = #tpu.dot_dimension_numbers<[1], [0], [0], [1], [0, 0, 1, 1], [], []>} : vector<16x256xbf16>, vector<256x256xbf16>, vector<16x256xf32> -> vector<16x256xf32>
    %c0_9 = arith.constant 0 : index
    %c0_10 = arith.constant 0 : index
    %11 = vector.load %arg5[%c0_9, %c0_10] : memref<1x256xf32, #tpu.memory_space<vmem>>, vector<1x256xf32>
    %12 = vector.broadcast %11 : vector<1x256xf32> to vector<16x256xf32>
    %13 = arith.addf %10, %12 : vector<16x256xf32>
    %14 = arith.mulf %13, %13 : vector<16x256xf32>
    %cst_11 = arith.constant dense<0.000000e+00> : vector<16xf32>
    %15 = vector.multi_reduction <add>, %14, %cst_11 [1] : vector<16x256xf32> to vector<16xf32>
    %16 = vector.shape_cast %15 : vector<16xf32> to vector<16x1xf32>
    %17 = math.sqrt %16 : vector<16x1xf32>
    %cst_12 = arith.constant 1.000000e-07 : f32
    %18 = vector.broadcast %cst_12 : f32 to vector<16x1xf32>
    %19 = arith.addf %17, %18 : vector<16x1xf32>
    %20 = tpu.reciprocal %19 {approx = true} : vector<16x1xf32> -> vector<16x1xf32>
    %21 = vector.broadcast %20 : vector<16x1xf32> to vector<16x256xf32>
    %22 = arith.mulf %13, %21 : vector<16x256xf32>
    %c0_13 = arith.constant 0 : index
    %c0_14 = arith.constant 0 : index
    %23 = vector.load %arg6[%c0_13, %c0_14] : memref<16x256xf32, #tpu.memory_space<vmem>>, vector<16x256xf32>
    tpu.vector_store %arg6[%c0_13, %c0_14], %22 {strides = array<i32>} : memref<16x256xf32, #tpu.memory_space<vmem>>, vector<16x256xf32>,
    return
  }
  func.func @transform_0(%arg0: i32) -> (i32, i32) {
    %c0_i32 = arith.constant 0 : i32
    %c0_i32_0 = arith.constant 0 : i32
    return %arg0, %c0_i32 : i32, i32
  }
  func.func @transform_1(%arg0: i32) -> (i32, i32) {
    %c0_i32 = arith.constant 0 : i32
    %c0_i32_0 = arith.constant 0 : i32
    %c0_i32_1 = arith.constant 0 : i32
    return %c0_i32, %c0_i32_0 : i32, i32
  }
  func.func @transform_2(%arg0: i32) -> (i32, i32) {
    %c0_i32 = arith.constant 0 : i32
    %c0_i32_0 = arith.constant 0 : i32
    %c0_i32_1 = arith.constant 0 : i32
    return %c0_i32, %c0_i32_0 : i32, i32
  }
  func.func @transform_3(%arg0: i32) -> (i32, i32) {
    %c0_i32 = arith.constant 0 : i32
    %c0_i32_0 = arith.constant 0 : i32
    %c0_i32_1 = arith.constant 0 : i32
    return %c0_i32, %c0_i32_0 : i32, i32
  }
  func.func @transform_4(%arg0: i32) -> (i32, i32) {
    %c0_i32 = arith.constant 0 : i32
    %c0_i32_0 = arith.constant 0 : i32
    %c0_i32_1 = arith.constant 0 : i32
    return %c0_i32, %c0_i32_0 : i32, i32
  }
  func.func @transform_5(%arg0: i32) -> (i32, i32) {
    %c0_i32 = arith.constant 0 : i32
    %c0_i32_0 = arith.constant 0 : i32
    return %arg0, %c0_i32 : i32, i32
  }
}

</mosaic_0001>

<llo_original>
// kernel: tpu_custom_call.1
$region0: #{tpu_custom_call.1}
  #allocation0 [shape = 'u32[]', space=smem, size = 0x4, offset = 0x4, fixed_abs, tag = 'smem constant byte address 0x4 - core index']
  #allocation1 [shape = 'u32[144,128]{1,0:T(1,128)}', space=vmem, size = 0x12000, scoped, tag = 'internal scratch']
  %s0 = inlined_call_operand.vmem [shape: bf16[16,8], index: 0, kind: input, shape index: {}]
  %s1 = inlined_call_operand.vmem [shape: bf16[8,256], index: 1, kind: input, shape index: {}]
  %s2 = inlined_call_operand.vmem [shape: f32[1,256], index: 2, kind: input, shape index: {}]
  %s3 = inlined_call_operand.hbm [shape: bf16[256,256], index: 3, kind: input, shape index: {}]
  %s4 = inlined_call_operand.vmem [shape: f32[1,256], index: 4, kind: input, shape index: {}]
  %s5 = inlined_call_operand.hbm [shape: f32[16,256], index: 5, kind: output, shape index: {}]
  %s6 = sld [smem:[#allocation0]]
  $region34: #{tpu_custom_call.1} parent=0
    _
  %s8 = ssub.s32 1, %s6
  %s9 = scalar_select 0, %s8, %s6
  $region1: #{tpu_custom_call.1} parent=0
    #allocation2 [shape = 'u8[131072]{0}', space=vmem, size = 0x20000, scoped, tag = 'input window, operand 3, single buffered']
    #allocation3 [shape = 's32[1]{0}', space=sflag, size = 0x4, scoped, tag = 'scoped memory for tpu_custom_call.1']
    #allocation4 [shape = 's32[1]{0}', space=sflag, size = 0x4, scoped, tag = 'scoped memory for tpu_custom_call.1']
    #allocation5 [shape = 'u8[16384]{0}', space=vmem, size = 0x4000, scoped, tag = 'output window, operand 0, single buffered']
    %10 = vsyncpa [#allocation3], 0
    %11 = vsyncpa [#allocation4], 0
    // Predicated region
    $region2: #{tpu_custom_call.1} parent=1 // pred_check
      _
    $region3: #{tpu_custom_call.1} parent=1 // pred_check_branch
      %13 = sbr.rel (0) target = $region5
    $region4: #{tpu_custom_call.1} parent=1 // pred_region
      _
    $region5: #{tpu_custom_call.1} parent=1 // pred_fallthru
      _
    // Predicated region
    $region6: #{tpu_custom_call.1} parent=1 // pred_check
      _
    $region7: #{tpu_custom_call.1} parent=1 // pred_check_branch
      %15 = sbr.rel (0) target = $region9
    $region8: #{tpu_custom_call.1} parent=1 // pred_region
      _
    $region9: #{tpu_custom_call.1} parent=1 // pred_fallthru
      _
    // Predicated region
    $region10: #{tpu_custom_call.1} parent=1 // pred_check
      _
    $region11: #{tpu_custom_call.1} parent=1 // pred_check_branch
      %17 = sbr.rel (0) target = $region13
    $region12: #{tpu_custom_call.1} parent=1 // pred_region
      _
    $region13: #{tpu_custom_call.1} parent=1 // pred_fallthru
      _
    // Predicated region
    $region14: #{tpu_custom_call.1} parent=1 // pred_check
      _
    $region15: #{tpu_custom_call.1} parent=1 // pred_check_branch
      %19 = sbr.rel (0) target = $region17
    $region16: #{tpu_custom_call.1} parent=1 // pred_region
      %s21 = ssub.s32 4096, 4096
      %22 = vsyncadd [#allocation3], %s21
      %s23 = sshll.u32 [#allocation2], 4
      %s24 = int_to_ptr.vmem [resolvable:$true] %s23
      %29 = dma.hbm_to_vmem [thread:$0]  %s3, 4096, %s24, [#allocation3], 128, 128, 8
    $region17: #{tpu_custom_call.1} parent=1 // pred_fallthru
      _
    // Predicated region
    $region18: #{tpu_custom_call.1} parent=1 // pred_check
      _
    $region19: #{tpu_custom_call.1} parent=1 // pred_check_branch
      %31 = sbr.rel (0) target = $region21
    $region20: #{tpu_custom_call.1} parent=1 // pred_region
      _
    $region21: #{tpu_custom_call.1} parent=1 // pred_fallthru
      _
    // Predicated region
    $region22: #{tpu_custom_call.1} parent=1 // pred_check
      _
    $region23: #{tpu_custom_call.1} parent=1 // pred_check_branch
      %33 = sbr.rel (0) target = $region25
    $region24: #{tpu_custom_call.1} parent=1 // pred_region
      %34 = dma.done [#allocation3], 4096
    $region25: #{tpu_custom_call.1} parent=1 // pred_fallthru
      _
    %v36 = vld [vmem:[%s0] sm:$0xf]
    %v37 = vld [vmem:[%s0 + $0x4] sm:$0xf]
    %v38 = vld [vmem:[%s1] sm:$0xff]
    %v39 = vld [vmem:[%s2] sm:$0x3]
    %v41 = vlaneseq
    %v42 = vshrl.u32 %v41, 7
    %v43 = vsub.s32 0, %v42
    %v44 = vrot.slane %v39, %v43
    %v45 = vlaneseq
    %v46 = vshrl.u32 %v45, 7
    %v47 = vsub.s32 1, %v46
    %v48 = vrot.slane %v39, %v47
    %v53 = vunpack.c.l.b16 %v36
    %v54 = vunpack.c.l.b16 %v37
    %v55 = vpack.c.b16 %v54, %v53
    %v57 = vunpack.c.l.b16 %v38
    %v58 = vunpack.c.h.b16 %v38
    %v59 = vpack.c.b16 %v57, %v57
    %v60 = vpack.c.b16 %v58, %v58
    %vm61 = vcmask 64512
    %v63 = vsel %vm61, %v55, 0
    %vm65 = vcmask 1043456
    %v67 = vsel %vm65, %v59, 0
    %v70 = vsel %vm65, %v60, 0
    %72 = vmatprep.subr.bf16.mxu0 %v70
    %73 = vmatpush1.bf16.msra.mxu0 %v67
    %74 = vmatprep.subr.bf16.mxu0 0
    %75 = vmatpush1.bf16.msra.mxu0 0
    %76 = vmatprep.subr.bf16.mxu0 0
    %77 = vmatpush1.bf16.msra.mxu0 0
    %78 = vmatprep.subr.bf16.mxu0 0
    %79 = vmatpush1.bf16.msra.mxu0 0
    %80 = vmatprep.subr.bf16.mxu0 0
    %81 = vmatpush1.bf16.msra.mxu0 0
    %82 = vmatprep.subr.bf16.mxu0 0
    %83 = vmatpush1.bf16.msra.mxu0 0
    %84 = vmatprep.subr.bf16.mxu0 0
    %85 = vmatpush1.bf16.msra.mxu0 0
    %86 = vmatprep.subr.bf16.mxu0 0
    %87 = vmatpush1.bf16.msra.mxu0 0
    %88 = vmatprep.subr.bf16.mxu0 0
    %89 = vmatpush1.bf16.msra.mxu0 0
    %90 = vmatprep.subr.bf16.mxu0 0
    %91 = vmatpush1.bf16.msra.mxu0 0
    %92 = vmatprep.subr.bf16.mxu0 0
    %93 = vmatpush1.bf16.msra.mxu0 0
    %94 = vmatprep.subr.bf16.mxu0 0
    %95 = vmatpush1.bf16.msra.mxu0 0
    %96 = vmatprep.subr.bf16.mxu0 0
    %97 = vmatpush1.bf16.msra.mxu0 0
    %98 = vmatprep.subr.bf16.mxu0 0
    %99 = vmatpush1.bf16.msra.mxu0 0
    %100 = vmatprep.subr.bf16.mxu0 0
    %101 = vmatpush1.bf16.msra.mxu0 0
    %102 = vmatprep.subr.bf16.mxu0 0
    %103 = vmatpush1.bf16.msra.mxu0 0
    %104 = vmatprep.mubr.bf16.mxu0 0
    %105 = vmatmul.mubr.bf16.gmra.mrb[0].mxu0 %v63
    %v106 = vpop.f32.mrb[0].mxu0
    %v107 = vadd.f32 %v44, %v106
    %v108 = vpop.f32.mrb[0].mxu0
    %v109 = vadd.f32 %v48, %v108
    %v110 = vpop.f32.mrb[0].mxu0
    %v111 = vadd.f32 %v44, %v110
    %v112 = vpop.f32.mrb[0].mxu0
    %v113 = vadd.f32 %v48, %v112
    %114 = vdwg.mxu0
    %v115 = vmax.f32 %v107, 0.0
    %v116 = vmax.f32 %v109, 0.0
    %v117 = vmax.f32 %v111, 0.0
    %v118 = vmax.f32 %v113, 0.0
    %v119 = vpack.c.bf16 %v117, %v115
    %v120 = vpack.c.bf16 %v118, %v116
    %v121 = vld [vmem:[#allocation2] sm:$0xff]
    %v122 = vld [vmem:[#allocation2 + $0x8] sm:$0xff]
    %v123 = vld [vmem:[#allocation2 + $0x10] sm:$0xff]
    %v124 = vld [vmem:[#allocation2 + $0x18] sm:$0xff]
    %v125 = vld [vmem:[#allocation2 + $0x20] sm:$0xff]
    %v126 = vld [vmem:[#allocation2 + $0x28] sm:$0xff]
    %v127 = vld [vmem:[#allocation2 + $0x30] sm:$0xff]
    %v128 = vld [vmem:[#allocation2 + $0x38] sm:$0xff]
    %v129 = vld [vmem:[#allocation2 + $0x40] sm:$0xff]
    %v130 = vld [vmem:[#allocation2 + $0x48] sm:$0xff]
    %v131 = vld [vmem:[#allocation2 + $0x50] sm:$0xff]
    %v132 = vld [vmem:[#allocation2 + $0x58] sm:$0xff]
    %v133 = vld [vmem:[#allocation2 + $0x60] sm:$0xff]
    %v134 = vld [vmem:[#allocation2 + $0x68] sm:$0xff]
    %v135 = vld [vmem:[#allocation2 + $0x70] sm:$0xff]
    %v136 = vld [vmem:[#allocation2 + $0x78] sm:$0xff]
    %v137 = vld [vmem:[#allocation2 + $0x80] sm:$0xff]
    %v138 = vld [vmem:[#allocation2 + $0x88] sm:$0xff]
    %v139 = vld [vmem:[#allocation2 + $0x90] sm:$0xff]
    %v140 = vld [vmem:[#allocation2 + $0x98] sm:$0xff]
    %v141 = vld [vmem:[#allocation2 + $0xa0] sm:$0xff]
    %v142 = vld [vmem:[#allocation2 + $0xa8] sm:$0xff]
    %v143 = vld [vmem:[#allocation2 + $0xb0] sm:$0xff]
    %v144 = vld [vmem:[#allocation2 + $0xb8] sm:$0xff]
    %v145 = vld [vmem:[#allocation2 + $0xc0] sm:$0xff]
    %v146 = vld [vmem:[#allocation2 + $0xc8] sm:$0xff]
    %v147 = vld [vmem:[#allocation2 + $0xd0] sm:$0xff]
    %v148 = vld [vmem:[#allocation2 + $0xd8] sm:$0xff]
    %v149 = vld [vmem:[#allocation2 + $0xe0] sm:$0xff]
    %v150 = vld [vmem:[#allocation2 + $0xe8] sm:$0xff]
    %v151 = vld [vmem:[#allocation2 + $0xf0] sm:$0xff]
    %v152 = vld [vmem:[#allocation2 + $0xf8] sm:$0xff]
    %v153 = vld [vmem:[%s4] sm:$0x3]
    %v155 = vlaneseq
    %v156 = vshrl.u32 %v155, 7
    %v157 = vsub.s32 0, %v156
    %v158 = vrot.slane %v153, %v157
    %v159 = vlaneseq
    %v160 = vshrl.u32 %v159, 7
    %v161 = vsub.s32 1, %v160
    %v162 = vrot.slane %v153, %v161
    %v197 = vunpack.c.l.b16 %v121
    %v198 = vunpack.c.h.b16 %v121
    %v199 = vunpack.c.l.b16 %v122
    %v200 = vunpack.c.h.b16 %v122
    %v201 = vunpack.c.l.b16 %v123
    %v202 = vunpack.c.h.b16 %v123
    %v203 = vunpack.c.l.b16 %v124
    %v204 = vunpack.c.h.b16 %v124
    %v205 = vunpack.c.l.b16 %v125
    %v206 = vunpack.c.h.b16 %v125
    %v207 = vunpack.c.l.b16 %v126
    %v208 = vunpack.c.h.b16 %v126
    %v209 = vunpack.c.l.b16 %v127
    %v210 = vunpack.c.h.b16 %v127
    %v211 = vunpack.c.l.b16 %v128
    %v212 = vunpack.c.h.b16 %v128
    %v213 = vunpack.c.l.b16 %v129
    %v214 = vunpack.c.h.b16 %v129
    %v215 = vunpack.c.l.b16 %v130
    %v216 = vunpack.c.h.b16 %v130
    %v217 = vunpack.c.l.b16 %v131
    %v218 = vunpack.c.h.b16 %v131
    %v219 = vunpack.c.l.b16 %v132
    %v220 = vunpack.c.h.b16 %v132
    %v221 = vunpack.c.l.b16 %v133
    %v222 = vunpack.c.h.b16 %v133
    %v223 = vunpack.c.l.b16 %v134
    %v224 = vunpack.c.h.b16 %v134
    %v225 = vunpack.c.l.b16 %v135
    %v226 = vunpack.c.h.b16 %v135
    %v227 = vunpack.c.l.b16 %v136
    %v228 = vunpack.c.h.b16 %v136
    %v229 = vunpack.c.l.b16 %v137
    %v230 = vunpack.c.h.b16 %v137
    %v231 = vunpack.c.l.b16 %v138
    %v232 = vunpack.c.h.b16 %v138
    %v233 = vunpack.c.l.b16 %v139
    %v234 = vunpack.c.h.b16 %v139
    %v235 = vunpack.c.l.b16 %v140
    %v236 = vunpack.c.h.b16 %v140
    %v237 = vunpack.c.l.b16 %v141
    %v238 = vunpack.c.h.b16 %v141
    %v239 = vunpack.c.l.b16 %v142
    %v240 = vunpack.c.h.b16 %v142
    %v241 = vunpack.c.l.b16 %v143
    %v242 = vunpack.c.h.b16 %v143
    %v243 = vunpack.c.l.b16 %v144
    %v244 = vunpack.c.h.b16 %v144
    %v245 = vunpack.c.l.b16 %v145
    %v246 = vunpack.c.h.b16 %v145
    %v247 = vunpack.c.l.b16 %v146
    %v248 = vunpack.c.h.b16 %v146
    %v249 = vunpack.c.l.b16 %v147
    %v250 = vunpack.c.h.b16 %v147
    %v251 = vunpack.c.l.b16 %v148
    %v252 = vunpack.c.h.b16 %v148
    %v253 = vunpack.c.l.b16 %v149
    %v254 = vunpack.c.h.b16 %v149
    %v255 = vunpack.c.l.b16 %v150
    %v256 = vunpack.c.h.b16 %v150
    %v257 = vunpack.c.l.b16 %v151
    %v258 = vunpack.c.h.b16 %v151
    %v259 = vunpack.c.l.b16 %v152
    %v260 = vunpack.c.h.b16 %v152
    %v261 = vpack.c.b16 %v199, %v197
    %v262 = vpack.c.b16 %v200, %v198
    %v263 = vpack.c.b16 %v203, %v201
    %v264 = vpack.c.b16 %v204, %v202
    %v265 = vpack.c.b16 %v207, %v205
    %v266 = vpack.c.b16 %v208, %v206
    %v267 = vpack.c.b16 %v211, %v209
    %v268 = vpack.c.b16 %v212, %v210
    %v269 = vpack.c.b16 %v215, %v213
    %v270 = vpack.c.b16 %v216, %v214
    %v271 = vpack.c.b16 %v219, %v217
    %v272 = vpack.c.b16 %v220, %v218
    %v273 = vpack.c.b16 %v223, %v221
    %v274 = vpack.c.b16 %v224, %v222
    %v275 = vpack.c.b16 %v227, %v225
    %v276 = vpack.c.b16 %v228, %v226
    %v277 = vpack.c.b16 %v231, %v229
    %v278 = vpack.c.b16 %v232, %v230
    %v279 = vpack.c.b16 %v235, %v233
    %v280 = vpack.c.b16 %v236, %v234
    %v281 = vpack.c.b16 %v239, %v237
    %v282 = vpack.c.b16 %v240, %v238
    %v283 = vpack.c.b16 %v243, %v241
    %v284 = vpack.c.b16 %v244, %v242
    %v285 = vpack.c.b16 %v247, %v245
    %v286 = vpack.c.b16 %v248, %v246
    %v287 = vpack.c.b16 %v251, %v249
    %v288 = vpack.c.b16 %v252, %v250
    %v289 = vpack.c.b16 %v255, %v253
    %v290 = vpack.c.b16 %v256, %v254
    %v291 = vpack.c.b16 %v259, %v257
    %v292 = vpack.c.b16 %v260, %v258
    %325 = vmatprep.subr.bf16.mxu0 %v262
    %326 = vmatpush1.bf16.msra.mxu0 %v261
    %327 = vmatprep.subr.bf16.mxu0 %v264
    %328 = vmatpush1.bf16.msra.mxu0 %v263
    %329 = vmatprep.subr.bf16.mxu0 %v266
    %330 = vmatpush1.bf16.msra.mxu0 %v265
    %331 = vmatprep.subr.bf16.mxu0 %v268
    %332 = vmatpush1.bf16.msra.mxu0 %v267
    %333 = vmatprep.subr.bf16.mxu0 %v270
    %334 = vmatpush1.bf16.msra.mxu0 %v269
    %335 = vmatprep.subr.bf16.mxu0 %v272
    %336 = vmatpush1.bf16.msra.mxu0 %v271
    %337 = vmatprep.subr.bf16.mxu0 %v274
    %338 = vmatpush1.bf16.msra.mxu0 %v273
    %339 = vmatprep.subr.bf16.mxu0 %v276
    %340 = vmatpush1.bf16.msra.mxu0 %v275
    %341 = vmatprep.subr.bf16.mxu0 %v278
    %342 = vmatpush1.bf16.msra.mxu0 %v277
    %343 = vmatprep.subr.bf16.mxu0 %v280
    %344 = vmatpush1.bf16.msra.mxu0 %v279
    %345 = vmatprep.subr.bf16.mxu0 %v282
    %346 = vmatpush1.bf16.msra.mxu0 %v281
    %347 = vmatprep.subr.bf16.mxu0 %v284
    %348 = vmatpush1.bf16.msra.mxu0 %v283
    %349 = vmatprep.subr.bf16.mxu0 %v286
    %350 = vmatpush1.bf16.msra.mxu0 %v285
    %351 = vmatprep.subr.bf16.mxu0 %v288
    %352 = vmatpush1.bf16.msra.mxu0 %v287
    %353 = vmatprep.subr.bf16.mxu0 %v290
    %354 = vmatpush1.bf16.msra.mxu0 %v289
    %355 = vmatprep.subr.bf16.mxu0 %v292
    %356 = vmatpush1.bf16.msra.mxu0 %v291
    %357 = vmatprep.mubr.bf16.mxu0 %v120
    %358 = vmatmul.mubr.bf16.gmra.mrb[0].mxu0 %v119
    %v359 = vpop.f32.mrb[0].mxu0
    %v360 = vadd.f32 %v158, %v359
    %v361 = vpop.f32.mrb[0].mxu0
    %v362 = vadd.f32 %v162, %v361
    %v363 = vpop.f32.mrb[0].mxu0
    %v364 = vadd.f32 %v158, %v363
    %v365 = vpop.f32.mrb[0].mxu0
    %v366 = vadd.f32 %v162, %v365
    %367 = vdwg.mxu0
    %v368 = vmul.f32 %v360, %v360
    %v369 = vmul.f32 %v362, %v362
    %v370 = vmul.f32 %v364, %v364
    %v371 = vmul.f32 %v366, %v366
    %v372 = vadd.f32 %v368, %v369
    %373 = vadd.xlane.f32.xlu0 %v372
    %v374 = vpop.xlane.xlu0 %373
    %v375 = vadd.f32 %v370, %v371
    %376 = vadd.xlane.f32.xlu0 %v375
    %v377 = vpop.xlane.xlu0 %376
    %v378 = vrsqrt.pop %v374
    %v379 = vmul.f32 %v374, %v378
    %vm380 = vcmp.eq.f32.partialorder %v374, inf
    %v381 = vsel %vm380, %v374, %v379
    %vm382 = vcmp.eq.f32.partialorder %v374, 0.0
    %v383 = vand.u32 %v374, 2147483648
    %v384 = vsel %vm382, %v383, %v381
    %v385 = vrsqrt.pop %v377
    %v386 = vmul.f32 %v377, %v385
    %vm387 = vcmp.eq.f32.partialorder %v377, inf
    %v388 = vsel %vm387, %v377, %v386
    %vm389 = vcmp.eq.f32.partialorder %v377, 0.0
    %v390 = vand.u32 %v377, 2147483648
    %v391 = vsel %vm389, %v390, %v388
    %v392 = vadd.f32 %v384, 1e-07
    %v393 = vadd.f32 %v391, 1e-07
    %v394 = vrcp.pop %v392
    %v395 = vrcp.pop %v393
    %v396 = vmul.f32 %v360, %v394
    %v397 = vmul.f32 %v362, %v394
    %v398 = vmul.f32 %v364, %v395
    %v399 = vmul.f32 %v366, %v395
    %400 = vst [vmem:[#allocation5] sm:$0xff] %v396
    %401 = vst [vmem:[#allocation5 + $0x8] sm:$0xff] %v397
    %402 = vst [vmem:[#allocation5 + $0x10] sm:$0xff] %v398
    %403 = vst [vmem:[#allocation5 + $0x18] sm:$0xff] %v399
    // Predicated region
    $region26: #{tpu_custom_call.1} parent=1 // pred_check
      _
    $region27: #{tpu_custom_call.1} parent=1 // pred_check_branch
      %405 = sbr.rel (0) target = $region29
    $region28: #{tpu_custom_call.1} parent=1 // pred_region
      %s407 = ssub.s32 512, 512
      %408 = vsyncadd [#allocation4], %s407
      %s409 = sshll.u32 [#allocation5], 4
      %s410 = int_to_ptr.vmem [resolvable:$true] %s409
      %415 = dma.vmem_to_hbm [thread:$0]  %s410, 512, %s5, [#allocation4], 256, 256, 16
    $region29: #{tpu_custom_call.1} parent=1 // pred_fallthru
      _
    // Predicated region
    $region30: #{tpu_custom_call.1} parent=1 // pred_check
      _
    $region31: #{tpu_custom_call.1} parent=1 // pred_check_branch
      %417 = sbr.rel (0) target = $region33
    $region32: #{tpu_custom_call.1} parent=1 // pred_region
      %418 = dma.done [#allocation4], 512
    $region33: #{tpu_custom_call.1} parent=1 // pred_fallthru
      _
    %419 = vsyncpa [#allocation3], 1
    %420 = vsyncpa [#allocation4], 1

</llo_original>
